<compile_context>
chip_gen: v7x
topology: tpu7x:2x2x1
jax: 0.10.0
libtpu: 0.0.40
codegen_flags: <defaults>
</compile_context>

<pallas_src>
import functools

import jax
import jax.numpy as jnp
from jax.experimental import pallas as pl
from jax.experimental.pallas import tpu as pltpu

SUBLANE = 8  # f32 sublanes per vreg


def mlp_kernel(x_ref, w1_ref, b1_ref, w2_ref, b2_ref, o_ref):
    """One batch tile.

    x_ref  : [IN, TB]   (batch on lanes)            VMEM, pipelined
    w1_ref : [Hp, IN]   (PyTorch fc1.weight layout) VMEM, grid-resident
    b1_ref : [Hp, 1]                                VMEM, grid-resident
    w2_ref : [Hp, 1]    (fc2.weight transposed)     VMEM, grid-resident
    b2_ref : [1]        scalar                      SMEM
    o_ref  : [1, TB]                                VMEM
    """
    h_dim, in_dim = w1_ref.shape
    tb = x_ref.shape[1]

    x = x_ref[...]                                   # [IN, TB]
    w1 = w1_ref[...]                                 # [Hp, IN]
    b1 = b1_ref[...]                                 # [Hp, 1]
    w2 = w2_ref[...]                                 # [Hp, 1]

    # Replicate each input row across one sublane group (8 rows).  Done once
    # per k and reused by every hidden-row group below, so the sublane
    # replication cost is O(IN * TB), independent of the hidden size.
    # TODO(synk): a stride-0 broadcast load (x_ref[pl.ds(k, 8, stride=0), :])
    # would move even this replication onto the (idle) vld path.
    xb = [jnp.broadcast_to(x[k:k + 1, :], (SUBLANE, tb)) for k in range(in_dim)]

    # fc1 + ReLU + fc2 partial reduce, one 8-row sublane group at a time.
    acc = jnp.zeros((SUBLANE, tb), jnp.float32)      # per-sublane fc2 partials
    for s in range(0, h_dim, SUBLANE):               # static, unrolled
        hg = jnp.broadcast_to(b1[s:s + SUBLANE, :], (SUBLANE, tb))
        for k in range(in_dim):                      # static, unrolled (IN=4)
            hg = hg + w1[s:s + SUBLANE, k:k + 1] * xb[k]
        hg = jnp.maximum(hg, 0.0)                    # ReLU
        acc = acc + w2[s:s + SUBLANE, :] * hg

    # Final 8-sublane reduce + scalar bias -> lane-dense [1, TB] store.
    out = jnp.sum(acc, axis=0, keepdims=True) + b2_ref[0]
    o_ref[...] = out.astype(o_ref.dtype)


def _round_up(n, m):
    return pl.cdiv(n, m) * m


@functools.partial(jax.jit, static_argnames=("block_b",))
def mlp_forward(x, w1, b1, w2, b2, *, block_b=65536):
    """x: [B, IN]; PyTorch-layout params: w1 [H, IN], b1 [H], w2 [1, H], b2 [1]."""
    B, IN = x.shape
    H = w1.shape[0]
    OUT = w2.shape[0]
    if OUT != 1:
        raise NotImplementedError("kernel is specialised for fc2: hidden -> 1")

    # ---- batch tile: lane-aligned (multiple of 128), big enough to amortise
    # the fixed per-grid-step overhead, capped so the grid has >=2 "parallel"
    # steps whenever the batch allows it (v7x dual-TensorCore sharding).
    b128 = _round_up(B, 128)
    tile = max(128, (min(block_b, b128) // 128) * 128)
    if b128 >= 2 * 128:
        tile = min(tile, _round_up(pl.cdiv(b128, 2), 128))
    b_pad = _round_up(B, tile)
    grid = (b_pad // tile,)

    # Batch-on-lanes layout; pad only when the tile does not divide the batch.
    # TODO(synk): accept x already as [IN, B] upstream to avoid this transpose
    # copy (the only whole-x HBM copy outside the kernel).
    xt = x.T                                          # [IN, B]
    if b_pad != B:
        xt = jnp.pad(xt, ((0, 0), (0, b_pad - B)))    # [IN, b_pad]

    # Pad the hidden dim to a multiple of 8 so the kernel works on whole
    # sublane groups; the zero rows contribute exactly 0 through w2 = 0.
    Hp = _round_up(H, SUBLANE)
    w1p = jnp.pad(w1, ((0, Hp - H), (0, 0)))          # [Hp, IN]
    b1p = jnp.pad(b1, ((0, Hp - H),)).reshape(Hp, 1)  # [Hp, 1]
    w2p = jnp.pad(w2.T, ((0, Hp - H), (0, 0)))        # [Hp, 1]
    b2s = b2.reshape((1,)).astype(jnp.float32)        # scalar -> SMEM

    cost = pl.CostEstimate(
        flops=2 * B * (IN * H + H * OUT),
        transcendentals=0,
        bytes_accessed=4 * (B * (IN + OUT) + Hp * (IN + 2) + 1),
    )

    out = pl.pallas_call(
        mlp_kernel,
        out_shape=jax.ShapeDtypeStruct((OUT, b_pad), jnp.float32),
        grid=grid,
        in_specs=[
            pl.BlockSpec((IN, tile), lambda i: (0, i)),          # x (pipelined)
            pl.BlockSpec((Hp, IN), lambda i: (0, 0)),            # w1 (resident)
            pl.BlockSpec((Hp, 1), lambda i: (0, 0)),             # b1 (resident)
            pl.BlockSpec((Hp, 1), lambda i: (0, 0)),             # w2^T (resident)
            pl.BlockSpec(memory_space=pltpu.MemorySpace.SMEM),   # b2 scalar
        ],
        out_specs=pl.BlockSpec((OUT, tile), lambda i: (0, i)),
        compiler_params=pltpu.CompilerParams(
            dimension_semantics=("parallel",),        # shard steps over TCs (v7x)
            vmem_limit_bytes=48 * 1024 * 1024,        # fits v7x 64 MiB VMEM
        ),
        cost_estimate=cost,
    )(xt, w1p, b1p, w2p, b2s)

    return out[:, :B].T                               # back to [B, 1]


def init_params(key, in_features=4, hidden_size=32, out_features=1):
    # PyTorch nn.Linear default init: U(-1/sqrt(fan_in), 1/sqrt(fan_in)),
    # stored in PyTorch layout: weight [out, in], bias [out].
    k1, k2, k3, k4 = jax.random.split(key, 4)
    bound1 = 1.0 / jnp.sqrt(in_features)
    bound2 = 1.0 / jnp.sqrt(hidden_size)
    w1 = jax.random.uniform(k1, (hidden_size, in_features), jnp.float32,
                            minval=-bound1, maxval=bound1)
    b1 = jax.random.uniform(k2, (hidden_size,), jnp.float32,
                            minval=-bound1, maxval=bound1)
    w2 = jax.random.uniform(k3, (out_features, hidden_size), jnp.float32,
                            minval=-bound2, maxval=bound2)
    b2 = jax.random.uniform(k4, (out_features,), jnp.float32,
                            minval=-bound2, maxval=bound2)
    return w1, b1, w2, b2


if __name__ == "__main__":
    key = jax.random.PRNGKey(0)
    kx, kp, kx2, kp2 = jax.random.split(key, 4)

    def reference(x, w1, b1, w2, b2):
        # Pure-JAX reference (PyTorch semantics: x @ W^T + b)
        return jnp.maximum(x @ w1.T + b1[None, :], 0.0) @ w2.T + b2[None, :]

    # Case 1: the module's nominal small shape (batch=8, hidden=32).
    x = jax.random.normal(kx, (8, 4), jnp.float32)
    w1, b1, w2, b2 = init_params(kp, in_features=4, hidden_size=32, out_features=1)
    out = jax.block_until_ready(mlp_forward(x, w1, b1, w2, b2))
    assert out.shape == (8, 1)
    assert jnp.allclose(out, reference(x, w1, b1, w2, b2), atol=1e-5, rtol=1e-5)

    # Case 2: exercise ragged batch, multi-step "parallel" grid, padded hidden.
    x2 = jax.random.normal(kx2, (300, 4), jnp.float32)
    w1b, b1b, w2b, b2b = init_params(kp2, in_features=4, hidden_size=20,
                                     out_features=1)
    out2 = jax.block_until_ready(mlp_forward(x2, w1b, b1b, w2b, b2b))
    assert out2.shape == (300, 1)
    assert jnp.allclose(out2, reference(x2, w1b, b1b, w2b, b2b),
                        atol=1e-5, rtol=1e-5)

    print("KERNEL_OK")
</pallas_src>

<mosaic_0001>
module attributes {stable_mosaic.version = 11 : i64} {
  func.func @mlp_kernel(%arg0: i32, %arg1: memref<4x128xf32, #tpu.memory_space<vmem>>, %arg2: memref<32x4xf32, #tpu.memory_space<vmem>>, %arg3: memref<32x1xf32, #tpu.memory_space<vmem>>, %arg4: memref<32x1xf32, #tpu.memory_space<vmem>>, %arg5: memref<1xf32, #tpu.memory_space<smem>>, %arg6: memref<1x128xf32, #tpu.memory_space<vmem>>) attributes {dimension_semantics = [#tpu.dimension_semantics<parallel>], iteration_bounds = array<i64: 1>, scalar_prefetch = 0 : i64, scratch_operands = 0 : i64, tpu.core_type = #tpu.core_type<tc>, window_params = [{transform_indices = @transform_0, window_bounds = array<i64: 4, 128>}, {pipeline_mode = #tpu.pipeline_mode<synchronous>, transform_indices = @transform_1, window_bounds = array<i64: 32, 4>}, {pipeline_mode = #tpu.pipeline_mode<synchronous>, transform_indices = @transform_2, window_bounds = array<i64: 32, 1>}, {pipeline_mode = #tpu.pipeline_mode<synchronous>, transform_indices = @transform_3, window_bounds = array<i64: 32, 1>}, {transform_indices = @transform_4, window_bounds = array<i64: 1>}, {transform_indices = @transform_5, window_bounds = array<i64: 1, 128>}]} {
    %c0 = arith.constant 0 : index
    %c0_0 = arith.constant 0 : index
    %0 = vector.load %arg1[%c0, %c0_0] : memref<4x128xf32, #tpu.memory_space<vmem>>, vector<4x128xf32>
    %c0_1 = arith.constant 0 : index
    %c0_2 = arith.constant 0 : index
    %1 = vector.load %arg2[%c0_1, %c0_2] : memref<32x4xf32, #tpu.memory_space<vmem>>, vector<32x4xf32>
    %c0_3 = arith.constant 0 : index
    %c0_4 = arith.constant 0 : index
    %2 = vector.load %arg3[%c0_3, %c0_4] : memref<32x1xf32, #tpu.memory_space<vmem>>, vector<32x1xf32>
    %c0_5 = arith.constant 0 : index
    %c0_6 = arith.constant 0 : index
    %3 = vector.load %arg4[%c0_5, %c0_6] : memref<32x1xf32, #tpu.memory_space<vmem>>, vector<32x1xf32>
    %4 = vector.extract_strided_slice %0 {offsets = [0, 0], sizes = [1, 128], strides = [1, 1]} : vector<4x128xf32> to vector<1x128xf32>
    %5 = vector.shape_cast %4 : vector<1x128xf32> to vector<1x128xf32>
    %6 = vector.broadcast %5 : vector<1x128xf32> to vector<8x128xf32>
    %7 = vector.extract_strided_slice %0 {offsets = [1, 0], sizes = [1, 128], strides = [1, 1]} : vector<4x128xf32> to vector<1x128xf32>
    %8 = vector.shape_cast %7 : vector<1x128xf32> to vector<1x128xf32>
    %9 = vector.broadcast %8 : vector<1x128xf32> to vector<8x128xf32>
    %10 = vector.extract_strided_slice %0 {offsets = [2, 0], sizes = [1, 128], strides = [1, 1]} : vector<4x128xf32> to vector<1x128xf32>
    %11 = vector.shape_cast %10 : vector<1x128xf32> to vector<1x128xf32>
    %12 = vector.broadcast %11 : vector<1x128xf32> to vector<8x128xf32>
    %13 = vector.extract_strided_slice %0 {offsets = [3, 0], sizes = [1, 128], strides = [1, 1]} : vector<4x128xf32> to vector<1x128xf32>
    %14 = vector.shape_cast %13 : vector<1x128xf32> to vector<1x128xf32>
    %15 = vector.broadcast %14 : vector<1x128xf32> to vector<8x128xf32>
    %cst = arith.constant 0.000000e+00 : f32
    %16 = vector.broadcast %cst : f32 to vector<8x128xf32>
    %17 = vector.extract_strided_slice %2 {offsets = [0, 0], sizes = [8, 1], strides = [1, 1]} : vector<32x1xf32> to vector<8x1xf32>
    %18 = vector.shape_cast %17 : vector<8x1xf32> to vector<8x1xf32>
    %19 = vector.broadcast %18 : vector<8x1xf32> to vector<8x128xf32>
    %20 = vector.extract_strided_slice %1 {offsets = [0, 0], sizes = [8, 1], strides = [1, 1]} : vector<32x4xf32> to vector<8x1xf32>
    %21 = vector.broadcast %20 : vector<8x1xf32> to vector<8x128xf32>
    %22 = arith.mulf %21, %6 : vector<8x128xf32>
    %23 = arith.addf %19, %22 : vector<8x128xf32>
    %24 = vector.extract_strided_slice %1 {offsets = [0, 1], sizes = [8, 1], strides = [1, 1]} : vector<32x4xf32> to vector<8x1xf32>
    %25 = vector.broadcast %24 : vector<8x1xf32> to vector<8x128xf32>
    %26 = arith.mulf %25, %9 : vector<8x128xf32>
    %27 = arith.addf %23, %26 : vector<8x128xf32>
    %28 = vector.extract_strided_slice %1 {offsets = [0, 2], sizes = [8, 1], strides = [1, 1]} : vector<32x4xf32> to vector<8x1xf32>
    %29 = vector.broadcast %28 : vector<8x1xf32> to vector<8x128xf32>
    %30 = arith.mulf %29, %12 : vector<8x128xf32>
    %31 = arith.addf %27, %30 : vector<8x128xf32>
    %32 = vector.extract_strided_slice %1 {offsets = [0, 3], sizes = [8, 1], strides = [1, 1]} : vector<32x4xf32> to vector<8x1xf32>
    %33 = vector.broadcast %32 : vector<8x1xf32> to vector<8x128xf32>
    %34 = arith.mulf %33, %15 : vector<8x128xf32>
    %35 = arith.addf %31, %34 : vector<8x128xf32>
    %cst_7 = arith.constant 0.000000e+00 : f32
    %36 = vector.broadcast %cst_7 : f32 to vector<8x128xf32>
    %37 = arith.maximumf %35, %36 : vector<8x128xf32>
    %38 = vector.extract_strided_slice %3 {offsets = [0, 0], sizes = [8, 1], strides = [1, 1]} : vector<32x1xf32> to vector<8x1xf32>
    %39 = vector.broadcast %38 : vector<8x1xf32> to vector<8x128xf32>
    %40 = arith.mulf %39, %37 : vector<8x128xf32>
    %41 = arith.addf %16, %40 : vector<8x128xf32>
    %42 = vector.extract_strided_slice %2 {offsets = [8, 0], sizes = [8, 1], strides = [1, 1]} : vector<32x1xf32> to vector<8x1xf32>
    %43 = vector.shape_cast %42 : vector<8x1xf32> to vector<8x1xf32>
    %44 = vector.broadcast %43 : vector<8x1xf32> to vector<8x128xf32>
    %45 = vector.extract_strided_slice %1 {offsets = [8, 0], sizes = [8, 1], strides = [1, 1]} : vector<32x4xf32> to vector<8x1xf32>
    %46 = vector.broadcast %45 : vector<8x1xf32> to vector<8x128xf32>
    %47 = arith.mulf %46, %6 : vector<8x128xf32>
    %48 = arith.addf %44, %47 : vector<8x128xf32>
    %49 = vector.extract_strided_slice %1 {offsets = [8, 1], sizes = [8, 1], strides = [1, 1]} : vector<32x4xf32> to vector<8x1xf32>
    %50 = vector.broadcast %49 : vector<8x1xf32> to vector<8x128xf32>
    %51 = arith.mulf %50, %9 : vector<8x128xf32>
    %52 = arith.addf %48, %51 : vector<8x128xf32>
    %53 = vector.extract_strided_slice %1 {offsets = [8, 2], sizes = [8, 1], strides = [1, 1]} : vector<32x4xf32> to vector<8x1xf32>
    %54 = vector.broadcast %53 : vector<8x1xf32> to vector<8x128xf32>
    %55 = arith.mulf %54, %12 : vector<8x128xf32>
    %56 = arith.addf %52, %55 : vector<8x128xf32>
    %57 = vector.extract_strided_slice %1 {offsets = [8, 3], sizes = [8, 1], strides = [1, 1]} : vector<32x4xf32> to vector<8x1xf32>
    %58 = vector.broadcast %57 : vector<8x1xf32> to vector<8x128xf32>
    %59 = arith.mulf %58, %15 : vector<8x128xf32>
    %60 = arith.addf %56, %59 : vector<8x128xf32>
    %cst_8 = arith.constant 0.000000e+00 : f32
    %61 = vector.broadcast %cst_8 : f32 to vector<8x128xf32>
    %62 = arith.maximumf %60, %61 : vector<8x128xf32>
    %63 = vector.extract_strided_slice %3 {offsets = [8, 0], sizes = [8, 1], strides = [1, 1]} : vector<32x1xf32> to vector<8x1xf32>
    %64 = vector.broadcast %63 : vector<8x1xf32> to vector<8x128xf32>
    %65 = arith.mulf %64, %62 : vector<8x128xf32>
    %66 = arith.addf %41, %65 : vector<8x128xf32>
    %67 = vector.extract_strided_slice %2 {offsets = [16, 0], sizes = [8, 1], strides = [1, 1]} : vector<32x1xf32> to vector<8x1xf32>
    %68 = vector.shape_cast %67 : vector<8x1xf32> to vector<8x1xf32>
    %69 = vector.broadcast %68 : vector<8x1xf32> to vector<8x128xf32>
    %70 = vector.extract_strided_slice %1 {offsets = [16, 0], sizes = [8, 1], strides = [1, 1]} : vector<32x4xf32> to vector<8x1xf32>
    %71 = vector.broadcast %70 : vector<8x1xf32> to vector<8x128xf32>
    %72 = arith.mulf %71, %6 : vector<8x128xf32>
    %73 = arith.addf %69, %72 : vector<8x128xf32>
    %74 = vector.extract_strided_slice %1 {offsets = [16, 1], sizes = [8, 1], strides = [1, 1]} : vector<32x4xf32> to vector<8x1xf32>
    %75 = vector.broadcast %74 : vector<8x1xf32> to vector<8x128xf32>
    %76 = arith.mulf %75, %9 : vector<8x128xf32>
    %77 = arith.addf %73, %76 : vector<8x128xf32>
    %78 = vector.extract_strided_slice %1 {offsets = [16, 2], sizes = [8, 1], strides = [1, 1]} : vector<32x4xf32> to vector<8x1xf32>
    %79 = vector.broadcast %78 : vector<8x1xf32> to vector<8x128xf32>
    %80 = arith.mulf %79, %12 : vector<8x128xf32>
    %81 = arith.addf %77, %80 : vector<8x128xf32>
    %82 = vector.extract_strided_slice %1 {offsets = [16, 3], sizes = [8, 1], strides = [1, 1]} : vector<32x4xf32> to vector<8x1xf32>
    %83 = vector.broadcast %82 : vector<8x1xf32> to vector<8x128xf32>
    %84 = arith.mulf %83, %15 : vector<8x128xf32>
    %85 = arith.addf %81, %84 : vector<8x128xf32>
    %cst_9 = arith.constant 0.000000e+00 : f32
    %86 = vector.broadcast %cst_9 : f32 to vector<8x128xf32>
    %87 = arith.maximumf %85, %86 : vector<8x128xf32>
    %88 = vector.extract_strided_slice %3 {offsets = [16, 0], sizes = [8, 1], strides = [1, 1]} : vector<32x1xf32> to vector<8x1xf32>
    %89 = vector.broadcast %88 : vector<8x1xf32> to vector<8x128xf32>
    %90 = arith.mulf %89, %87 : vector<8x128xf32>
    %91 = arith.addf %66, %90 : vector<8x128xf32>
    %92 = vector.extract_strided_slice %2 {offsets = [24, 0], sizes = [8, 1], strides = [1, 1]} : vector<32x1xf32> to vector<8x1xf32>
    %93 = vector.shape_cast %92 : vector<8x1xf32> to vector<8x1xf32>
    %94 = vector.broadcast %93 : vector<8x1xf32> to vector<8x128xf32>
    %95 = vector.extract_strided_slice %1 {offsets = [24, 0], sizes = [8, 1], strides = [1, 1]} : vector<32x4xf32> to vector<8x1xf32>
    %96 = vector.broadcast %95 : vector<8x1xf32> to vector<8x128xf32>
    %97 = arith.mulf %96, %6 : vector<8x128xf32>
    %98 = arith.addf %94, %97 : vector<8x128xf32>
    %99 = vector.extract_strided_slice %1 {offsets = [24, 1], sizes = [8, 1], strides = [1, 1]} : vector<32x4xf32> to vector<8x1xf32>
    %100 = vector.broadcast %99 : vector<8x1xf32> to vector<8x128xf32>
    %101 = arith.mulf %100, %9 : vector<8x128xf32>
    %102 = arith.addf %98, %101 : vector<8x128xf32>
    %103 = vector.extract_strided_slice %1 {offsets = [24, 2], sizes = [8, 1], strides = [1, 1]} : vector<32x4xf32> to vector<8x1xf32>
    %104 = vector.broadcast %103 : vector<8x1xf32> to vector<8x128xf32>
    %105 = arith.mulf %104, %12 : vector<8x128xf32>
    %106 = arith.addf %102, %105 : vector<8x128xf32>
    %107 = vector.extract_strided_slice %1 {offsets = [24, 3], sizes = [8, 1], strides = [1, 1]} : vector<32x4xf32> to vector<8x1xf32>
    %108 = vector.broadcast %107 : vector<8x1xf32> to vector<8x128xf32>
    %109 = arith.mulf %108, %15 : vector<8x128xf32>
    %110 = arith.addf %106, %109 : vector<8x128xf32>
    %cst_10 = arith.constant 0.000000e+00 : f32
    %111 = vector.broadcast %cst_10 : f32 to vector<8x128xf32>
    %112 = arith.maximumf %110, %111 : vector<8x128xf32>
    %113 = vector.extract_strided_slice %3 {offsets = [24, 0], sizes = [8, 1], strides = [1, 1]} : vector<32x1xf32> to vector<8x1xf32>
    %114 = vector.broadcast %113 : vector<8x1xf32> to vector<8x128xf32>
    %115 = arith.mulf %114, %112 : vector<8x128xf32>
    %116 = arith.addf %91, %115 : vector<8x128xf32>
    %cst_11 = arith.constant dense<0.000000e+00> : vector<128xf32>
    %117 = vector.multi_reduction <add>, %116, %cst_11 [0] : vector<8x128xf32> to vector<128xf32>
    %118 = vector.shape_cast %117 : vector<128xf32> to vector<1x128xf32>
    %c0_12 = arith.constant 0 : index
    %119 = memref.load %arg5[%c0_12] : memref<1xf32, #tpu.memory_space<smem>>
    %120 = vector.broadcast %119 : f32 to vector<1x128xf32>
    %121 = arith.addf %118, %120 : vector<1x128xf32>
    %c0_13 = arith.constant 0 : index
    %c0_14 = arith.constant 0 : index
    %122 = vector.load %arg6[%c0_13, %c0_14] : memref<1x128xf32, #tpu.memory_space<vmem>>, vector<1x128xf32>
    tpu.vector_store %arg6[%c0_13, %c0_14], %121 {strides = array<i32>} : memref<1x128xf32, #tpu.memory_space<vmem>>, vector<1x128xf32>,
    return
  }
  func.func @transform_0(%arg0: i32) -> (i32, i32) {
    %c0_i32 = arith.constant 0 : i32
    %c0_i32_0 = arith.constant 0 : i32
    return %c0_i32, %arg0 : i32, i32
  }
  func.func @transform_1(%arg0: i32) -> (i32, i32) {
    %c0_i32 = arith.constant 0 : i32
    %c0_i32_0 = arith.constant 0 : i32
    %c0_i32_1 = arith.constant 0 : i32
    return %c0_i32, %c0_i32_0 : i32, i32
  }
  func.func @transform_2(%arg0: i32) -> (i32, i32) {
    %c0_i32 = arith.constant 0 : i32
    %c0_i32_0 = arith.constant 0 : i32
    %c0_i32_1 = arith.constant 0 : i32
    return %c0_i32, %c0_i32_0 : i32, i32
  }
  func.func @transform_3(%arg0: i32) -> (i32, i32) {
    %c0_i32 = arith.constant 0 : i32
    %c0_i32_0 = arith.constant 0 : i32
    %c0_i32_1 = arith.constant 0 : i32
    return %c0_i32, %c0_i32_0 : i32, i32
  }
  func.func @transform_4(%arg0: i32) -> i32 {
    %c0_i32 = arith.constant 0 : i32
    %c0_i32_0 = arith.constant 0 : i32
    return %c0_i32 : i32
  }
  func.func @transform_5(%arg0: i32) -> (i32, i32) {
    %c0_i32 = arith.constant 0 : i32
    %c0_i32_0 = arith.constant 0 : i32
    return %c0_i32, %arg0 : i32, i32
  }
}

</mosaic_0001>

<llo_original>
// kernel: mlp_forward.1
$region0: #{mlp_forward.1}
  #allocation0 [shape = 'u32[]', space=smem, size = 0x4, offset = 0x4, fixed_abs, tag = 'smem constant byte address 0x4 - core index']
  #allocation1 [shape = 'u32[144,128]{1,0:T(1,128)}', space=vmem, size = 0x12000, scoped, tag = 'internal scratch']
  #allocation2 [shape = 'f32[1]{0:T(128)S(6)}', space=smem, size = 0x200, scoped, tag = 'scoped memory for mlp_forward.1']
  %s0 = inlined_call_operand.vmem [shape: f32[4,128], index: 0, kind: input, shape index: {}]
  %s1 = inlined_call_operand.vmem [shape: f32[32,4], index: 1, kind: input, shape index: {}]
  %s2 = inlined_call_operand.vmem [shape: f32[32,1], index: 2, kind: input, shape index: {}]
  %s3 = inlined_call_operand.vmem [shape: f32[32,1], index: 3, kind: input, shape index: {}]
  %s4 = inlined_call_operand.<no memory space> [shape: f32[1], index: 4, kind: input, shape index: {}]
  %s5 = inlined_call_operand.vmem [shape: f32[1,128], index: 5, kind: output, shape index: {}]
  %s6 = sld [smem:[#allocation0]]
  $region30: #{mlp_forward.1} parent=0
    _
  %s8 = ssub.s32 1, %s6
  %s9 = scalar_select 0, %s8, %s6
  %10 = sst [smem:[#allocation2]] %s4
  // Predicated region
  $region2: #{mlp_forward.1} parent=0 // pred_check
    _
  $region3: #{mlp_forward.1} parent=0 // pred_check_branch
    %12 = sbr.rel (0) target = $region5
  $region4: #{mlp_forward.1} parent=0 // pred_region
    _
  $region5: #{mlp_forward.1} parent=0 // pred_fallthru
    _
  // Predicated region
  $region6: #{mlp_forward.1} parent=0 // pred_check
    _
  $region7: #{mlp_forward.1} parent=0 // pred_check_branch
    %14 = sbr.rel (0) target = $region9
  $region8: #{mlp_forward.1} parent=0 // pred_region
    _
  $region9: #{mlp_forward.1} parent=0 // pred_fallthru
    _
  // Predicated region
  $region10: #{mlp_forward.1} parent=0 // pred_check
    _
  $region11: #{mlp_forward.1} parent=0 // pred_check_branch
    %16 = sbr.rel (0) target = $region13
  $region12: #{mlp_forward.1} parent=0 // pred_region
    _
  $region13: #{mlp_forward.1} parent=0 // pred_fallthru
    _
  // Predicated region
  $region14: #{mlp_forward.1} parent=0 // pred_check
    _
  $region15: #{mlp_forward.1} parent=0 // pred_check_branch
    %18 = sbr.rel (0) target = $region17
  $region16: #{mlp_forward.1} parent=0 // pred_region
    _
  $region17: #{mlp_forward.1} parent=0 // pred_fallthru
    _
  // Predicated region
  $region18: #{mlp_forward.1} parent=0 // pred_check
    _
  $region19: #{mlp_forward.1} parent=0 // pred_check_branch
    %20 = sbr.rel (0) target = $region21
  $region20: #{mlp_forward.1} parent=0 // pred_region
    _
  $region21: #{mlp_forward.1} parent=0 // pred_fallthru
    _
  %v21 = vld [vmem:[%s0] sm:$0xf]
  %v22 = vld [vmem:[%s1] sm:$0xff]
  %v23 = vld [vmem:[%s1 + $0x8] sm:$0xff]
  %v24 = vld [vmem:[%s1 + $0x10] sm:$0xff]
  %v25 = vld [vmem:[%s1 + $0x18] sm:$0xff]
  %v26 = vld [vmem:[%s2] sm:$0xff]
  %v27 = vld [vmem:[%s2 + $0x8] sm:$0xff]
  %v28 = vld [vmem:[%s2 + $0x10] sm:$0xff]
  %v29 = vld [vmem:[%s2 + $0x18] sm:$0xff]
  %v30 = vld [vmem:[%s3] sm:$0xff]
  %v31 = vld [vmem:[%s3 + $0x8] sm:$0xff]
  %v32 = vld [vmem:[%s3 + $0x10] sm:$0xff]
  %v33 = vld [vmem:[%s3 + $0x18] sm:$0xff]
  %v34 = vlaneseq
  %v35 = vshrl.u32 %v34, 7
  %v36 = vsub.s32 0, %v35
  %v37 = vrot.slane %v21, %v36
  %v38 = vlaneseq
  %v39 = vshrl.u32 %v38, 7
  %v40 = vsub.s32 1, %v39
  %v41 = vrot.slane %v21, %v40
  %v42 = vlaneseq
  %v43 = vshrl.u32 %v42, 7
  %v44 = vsub.s32 2, %v43
  %v45 = vrot.slane %v21, %v44
  %v46 = vlaneseq
  %v47 = vshrl.u32 %v46, 7
  %v48 = vsub.s32 3, %v47
  %v49 = vrot.slane %v21, %v48
  %51 = vset.pattern.permute.xlu0 0
  %52 = vperm.xlu0 %51, %v26
  %v53 = vpop.permute.xlu0 %52
  %56 = vset.pattern.permute.xlu0 0
  %57 = vperm.xlu0 %56, %v22
  %v58 = vpop.permute.xlu0 %57
  %v60 = vmul.f32 %v58, %v37
  %v61 = vadd.f32 %v53, %v60
  %62 = vset.pattern.permute.xlu0 1
  %63 = vperm.xlu0 %62, %v22
  %v64 = vpop.permute.xlu0 %63
  %v66 = vmul.f32 %v64, %v41
  %v67 = vadd.f32 %v61, %v66
  %68 = vset.pattern.permute.xlu0 2
  %69 = vperm.xlu0 %68, %v22
  %v70 = vpop.permute.xlu0 %69
  %v72 = vmul.f32 %v70, %v45
  %v73 = vadd.f32 %v67, %v72
  %74 = vset.pattern.permute.xlu0 3
  %75 = vperm.xlu0 %74, %v22
  %v76 = vpop.permute.xlu0 %75
  %v78 = vmul.f32 %v76, %v49
  %v79 = vadd.f32 %v73, %v78
  %v80 = vmax.f32 %v79, 0.0
  %82 = vset.pattern.permute.xlu0 0
  %83 = vperm.xlu0 %82, %v30
  %v84 = vpop.permute.xlu0 %83
  %v86 = vmul.f32 %v84, %v80
  %v87 = vadd.f32 %v86, 0.0
  %89 = vset.pattern.permute.xlu0 0
  %90 = vperm.xlu0 %89, %v27
  %v91 = vpop.permute.xlu0 %90
  %94 = vset.pattern.permute.xlu0 0
  %95 = vperm.xlu0 %94, %v23
  %v96 = vpop.permute.xlu0 %95
  %v98 = vmul.f32 %v96, %v37
  %v99 = vadd.f32 %v91, %v98
  %100 = vset.pattern.permute.xlu0 1
  %101 = vperm.xlu0 %100, %v23
  %v102 = vpop.permute.xlu0 %101
  %v104 = vmul.f32 %v102, %v41
  %v105 = vadd.f32 %v99, %v104
  %106 = vset.pattern.permute.xlu0 2
  %107 = vperm.xlu0 %106, %v23
  %v108 = vpop.permute.xlu0 %107
  %v110 = vmul.f32 %v108, %v45
  %v111 = vadd.f32 %v105, %v110
  %112 = vset.pattern.permute.xlu0 3
  %113 = vperm.xlu0 %112, %v23
  %v114 = vpop.permute.xlu0 %113
  %v116 = vmul.f32 %v114, %v49
  %v117 = vadd.f32 %v111, %v116
  %v118 = vmax.f32 %v117, 0.0
  %120 = vset.pattern.permute.xlu0 0
  %121 = vperm.xlu0 %120, %v31
  %v122 = vpop.permute.xlu0 %121
  %v124 = vmul.f32 %v122, %v118
  %v125 = vadd.f32 %v87, %v124
  %127 = vset.pattern.permute.xlu0 0
  %128 = vperm.xlu0 %127, %v28
  %v129 = vpop.permute.xlu0 %128
  %132 = vset.pattern.permute.xlu0 0
  %133 = vperm.xlu0 %132, %v24
  %v134 = vpop.permute.xlu0 %133
  %v136 = vmul.f32 %v134, %v37
  %v137 = vadd.f32 %v129, %v136
  %138 = vset.pattern.permute.xlu0 1
  %139 = vperm.xlu0 %138, %v24
  %v140 = vpop.permute.xlu0 %139
  %v142 = vmul.f32 %v140, %v41
  %v143 = vadd.f32 %v137, %v142
  %144 = vset.pattern.permute.xlu0 2
  %145 = vperm.xlu0 %144, %v24
  %v146 = vpop.permute.xlu0 %145
  %v148 = vmul.f32 %v146, %v45
  %v149 = vadd.f32 %v143, %v148
  %150 = vset.pattern.permute.xlu0 3
  %151 = vperm.xlu0 %150, %v24
  %v152 = vpop.permute.xlu0 %151
  %v154 = vmul.f32 %v152, %v49
  %v155 = vadd.f32 %v149, %v154
  %v156 = vmax.f32 %v155, 0.0
  %158 = vset.pattern.permute.xlu0 0
  %159 = vperm.xlu0 %158, %v32
  %v160 = vpop.permute.xlu0 %159
  %v162 = vmul.f32 %v160, %v156
  %v163 = vadd.f32 %v125, %v162
  %165 = vset.pattern.permute.xlu0 0
  %166 = vperm.xlu0 %165, %v29
  %v167 = vpop.permute.xlu0 %166
  %170 = vset.pattern.permute.xlu0 0
  %171 = vperm.xlu0 %170, %v25
  %v172 = vpop.permute.xlu0 %171
  %v174 = vmul.f32 %v172, %v37
  %v175 = vadd.f32 %v167, %v174
  %176 = vset.pattern.permute.xlu0 1
  %177 = vperm.xlu0 %176, %v25
  %v178 = vpop.permute.xlu0 %177
  %v180 = vmul.f32 %v178, %v41
  %v181 = vadd.f32 %v175, %v180
  %182 = vset.pattern.permute.xlu0 2
  %183 = vperm.xlu0 %182, %v25
  %v184 = vpop.permute.xlu0 %183
  %v186 = vmul.f32 %v184, %v45
  %v187 = vadd.f32 %v181, %v186
  %188 = vset.pattern.permute.xlu0 3
  %189 = vperm.xlu0 %188, %v25
  %v190 = vpop.permute.xlu0 %189
  %v192 = vmul.f32 %v190, %v49
  %v193 = vadd.f32 %v187, %v192
  %v194 = vmax.f32 %v193, 0.0
  %196 = vset.pattern.permute.xlu0 0
  %197 = vperm.xlu0 %196, %v33
  %v198 = vpop.permute.xlu0 %197
  %v200 = vmul.f32 %v198, %v194
  %v201 = vadd.f32 %v163, %v200
  %v202 = vrot.slane %v201, 4
  %v203 = vadd.f32 %v201, %v202
  %v204 = vrot.slane %v203, 2
  %v205 = vadd.f32 %v203, %v204
  %v206 = vrot.slane %v205, 1
  %v207 = vadd.f32 %v205, %v206
  %s208 = sld [smem:[#allocation2]]
  %v209 = vstv %s208
  %v210 = vadd.f32 %v207, %v209
  %211 = vst [vmem:[%s5] sm:$0x1] %v210
  // Predicated region
  $region22: #{mlp_forward.1} parent=0 // pred_check
    _
  $region23: #{mlp_forward.1} parent=0 // pred_check_branch
    %213 = sbr.rel (0) target = $region25
  $region24: #{mlp_forward.1} parent=0 // pred_region
    _
  $region25: #{mlp_forward.1} parent=0 // pred_fallthru
    _
  // Predicated region
  $region26: #{mlp_forward.1} parent=0 // pred_check
    _
  $region27: #{mlp_forward.1} parent=0 // pred_check_branch
    %215 = sbr.rel (0) target = $region29
  $region28: #{mlp_forward.1} parent=0 // pred_region
    _
  $region29: #{mlp_forward.1} parent=0 // pred_fallthru
    _

</llo_original>
